<compile_context>
chip_gen: v6e
topology: v6e:2x2x1
jax: 0.10.0
libtpu: 0.0.40
codegen_flags: <defaults>
</compile_context>

<pallas_src>
import functools
import math

import jax
import jax.numpy as jnp
from jax.experimental import pallas as pl
from jax.experimental.pallas import tpu as pltpu

N_IN, N_HID, N_OUT = 11, 6, 2


def _mlp_kernel(w1_ref, b1_ref, w2_ref, b2_ref, x_ref, o_ref):
    """One batch tile, feature-major.

    w1_ref: (11, 6) SMEM    b1_ref: (6,) SMEM
    w2_ref: (6, 2)  SMEM    b2_ref: (2,) SMEM
    x_ref : (11, TB) VMEM   (features x batch-lanes)
    o_ref : (2,  TB) VMEM
    """
    x = x_ref[...]  # (11, TB) float32

    # fc1 + ReLU: h[j] = relu(b1[j] + sum_k w1[k, j] * x[k, :])  (VPU FMAs)
    h = []
    for j in range(N_HID):
        acc = w1_ref[0, j] * x[0:1, :]
        for k in range(1, N_IN):
            acc = acc + w1_ref[k, j] * x[k:k + 1, :]
        h.append(jnp.maximum(acc + b1_ref[j], 0.0))

    # fc2 + activation: sigmoid(z)*2 - 1 == tanh(z/2)  (EUP transcendental)
    for j in range(N_OUT):
        z = w2_ref[0, j] * h[0]
        for k in range(1, N_HID):
            z = z + w2_ref[k, j] * h[k]
        o_ref[j:j + 1, :] = jnp.tanh(0.5 * (z + b2_ref[j]))


def _round_up(n, m):
    return ((n + m - 1) // m) * m


@functools.partial(jax.jit, static_argnames=("tile_b",))
def net_forward(x, w1, b1, w2, b2, *, tile_b=512):
    """x: (B, 11) float32 -> (B, 2) float32 (same semantics as the torch Net)."""
    B = x.shape[0]
    tb = min(tile_b, _round_up(B, 128))   # lane-dense tile, multiple of 128
    bp = _round_up(B, tb)                 # padded batch

    # Feature-major, lane-dense layout: (11, Bp).  Padded columns are sliced off.
    xt = jnp.pad(x.astype(jnp.float32).T, ((0, 0), (0, bp - B)))

    out_t = pl.pallas_call(
        _mlp_kernel,
        out_shape=jax.ShapeDtypeStruct((N_OUT, bp), jnp.float32),
        grid_spec=pltpu.PrefetchScalarGridSpec(
            num_scalar_prefetch=0,
            grid=(bp // tb,),
            in_specs=[
                pl.BlockSpec(memory_space=pltpu.MemorySpace.SMEM),   # w1 (resident)
                pl.BlockSpec(memory_space=pltpu.MemorySpace.SMEM),   # b1
                pl.BlockSpec(memory_space=pltpu.MemorySpace.SMEM),   # w2
                pl.BlockSpec(memory_space=pltpu.MemorySpace.SMEM),   # b2
                pl.BlockSpec((N_IN, tb), lambda i: (0, i)),          # x tile
            ],
            out_specs=pl.BlockSpec((N_OUT, tb), lambda i: (0, i)),
        ),
        compiler_params=pltpu.CompilerParams(
            dimension_semantics=("parallel",),   # shard batch tiles across TCs (v7x)
        ),
    )(w1, b1, w2, b2, xt)

    return out_t[:, :B].T


# ----------------------- init (matches the torch module) -----------------------

def _xavier_uniform(key, fan_in, fan_out):
    """torch.nn.init.xavier_uniform_; stored transposed (in, out) for x @ W."""
    bound = math.sqrt(6.0 / (fan_in + fan_out))
    return jax.random.uniform(key, (fan_in, fan_out), jnp.float32, -bound, bound)


def _linear_bias(key, fan_in, fan_out):
    """torch nn.Linear default bias init: U(-1/sqrt(fan_in), 1/sqrt(fan_in))."""
    bound = 1.0 / math.sqrt(fan_in)
    return jax.random.uniform(key, (fan_out,), jnp.float32, -bound, bound)


def init_params(key):
    k1, k2, k3, k4 = jax.random.split(key, 4)
    w1 = _xavier_uniform(k1, N_IN, N_HID)   # fc1.weight^T : (11, 6)
    b1 = _linear_bias(k2, N_IN, N_HID)      # fc1.bias     : (6,)
    w2 = _xavier_uniform(k3, N_HID, N_OUT)  # fc2.weight^T : (6, 2)
    b2 = _linear_bias(k4, N_HID, N_OUT)     # fc2.bias     : (2,)
    return w1, b1, w2, b2


def _reference(x, w1, b1, w2, b2):
    h = jnp.maximum(x @ w1 + b1, 0.0)
    return jax.nn.sigmoid(h @ w2 + b2) * 2.0 - 1.0


if __name__ == "__main__":
    key = jax.random.PRNGKey(0)
    k_params, k_x1, k_x2 = jax.random.split(key, 3)
    w1, b1, w2, b2 = init_params(k_params)

    # Small batch (original use case) + a multi-tile batch to exercise the grid.
    for bsz, kx in ((8, k_x1), (1500, k_x2)):
        x = jax.random.normal(kx, (bsz, N_IN), dtype=jnp.float32)
        out = jax.block_until_ready(net_forward(x, w1, b1, w2, b2))
        ref = _reference(x, w1, b1, w2, b2)
        assert out.shape == (bsz, N_OUT), out.shape
        assert jnp.allclose(out, ref, atol=2e-5, rtol=2e-5), f"mismatch at B={bsz}"

    print("KERNEL_OK")
</pallas_src>

<mosaic_0001>
module attributes {stable_mosaic.version = 11 : i64} {
  func.func @_mlp_kernel(%arg0: i32, %arg1: memref<11x6xf32, #tpu.memory_space<smem>>, %arg2: memref<6xf32, #tpu.memory_space<smem>>, %arg3: memref<6x2xf32, #tpu.memory_space<smem>>, %arg4: memref<2xf32, #tpu.memory_space<smem>>, %arg5: memref<11x128xf32, #tpu.memory_space<vmem>>, %arg6: memref<2x128xf32, #tpu.memory_space<vmem>>) attributes {dimension_semantics = [#tpu.dimension_semantics<parallel>], iteration_bounds = array<i64: 1>, scalar_prefetch = 0 : i64, scratch_operands = 0 : i64, tpu.core_type = #tpu.core_type<tc>, window_params = [{transform_indices = @transform_0, window_bounds = array<i64: 11, 6>}, {transform_indices = @transform_1, window_bounds = array<i64: 6>}, {transform_indices = @transform_2, window_bounds = array<i64: 6, 2>}, {transform_indices = @transform_3, window_bounds = array<i64: 2>}, {transform_indices = @transform_4, window_bounds = array<i64: 11, 128>}, {transform_indices = @transform_5, window_bounds = array<i64: 2, 128>}]} {
    %c0 = arith.constant 0 : index
    %c0_0 = arith.constant 0 : index
    %0 = vector.load %arg5[%c0, %c0_0] : memref<11x128xf32, #tpu.memory_space<vmem>>, vector<11x128xf32>
    %c0_1 = arith.constant 0 : index
    %c0_2 = arith.constant 0 : index
    %1 = memref.load %arg1[%c0_1, %c0_2] : memref<11x6xf32, #tpu.memory_space<smem>>
    %2 = vector.extract_strided_slice %0 {offsets = [0, 0], sizes = [1, 128], strides = [1, 1]} : vector<11x128xf32> to vector<1x128xf32>
    %3 = vector.broadcast %1 : f32 to vector<1x128xf32>
    %4 = arith.mulf %3, %2 : vector<1x128xf32>
    %c1 = arith.constant 1 : index
    %c0_3 = arith.constant 0 : index
    %5 = memref.load %arg1[%c1, %c0_3] : memref<11x6xf32, #tpu.memory_space<smem>>
    %6 = vector.extract_strided_slice %0 {offsets = [1, 0], sizes = [1, 128], strides = [1, 1]} : vector<11x128xf32> to vector<1x128xf32>
    %7 = vector.broadcast %5 : f32 to vector<1x128xf32>
    %8 = arith.mulf %7, %6 : vector<1x128xf32>
    %9 = arith.addf %4, %8 : vector<1x128xf32>
    %c2 = arith.constant 2 : index
    %c0_4 = arith.constant 0 : index
    %10 = memref.load %arg1[%c2, %c0_4] : memref<11x6xf32, #tpu.memory_space<smem>>
    %11 = vector.extract_strided_slice %0 {offsets = [2, 0], sizes = [1, 128], strides = [1, 1]} : vector<11x128xf32> to vector<1x128xf32>
    %12 = vector.broadcast %10 : f32 to vector<1x128xf32>
    %13 = arith.mulf %12, %11 : vector<1x128xf32>
    %14 = arith.addf %9, %13 : vector<1x128xf32>
    %c3 = arith.constant 3 : index
    %c0_5 = arith.constant 0 : index
    %15 = memref.load %arg1[%c3, %c0_5] : memref<11x6xf32, #tpu.memory_space<smem>>
    %16 = vector.extract_strided_slice %0 {offsets = [3, 0], sizes = [1, 128], strides = [1, 1]} : vector<11x128xf32> to vector<1x128xf32>
    %17 = vector.broadcast %15 : f32 to vector<1x128xf32>
    %18 = arith.mulf %17, %16 : vector<1x128xf32>
    %19 = arith.addf %14, %18 : vector<1x128xf32>
    %c4 = arith.constant 4 : index
    %c0_6 = arith.constant 0 : index
    %20 = memref.load %arg1[%c4, %c0_6] : memref<11x6xf32, #tpu.memory_space<smem>>
    %21 = vector.extract_strided_slice %0 {offsets = [4, 0], sizes = [1, 128], strides = [1, 1]} : vector<11x128xf32> to vector<1x128xf32>
    %22 = vector.broadcast %20 : f32 to vector<1x128xf32>
    %23 = arith.mulf %22, %21 : vector<1x128xf32>
    %24 = arith.addf %19, %23 : vector<1x128xf32>
    %c5 = arith.constant 5 : index
    %c0_7 = arith.constant 0 : index
    %25 = memref.load %arg1[%c5, %c0_7] : memref<11x6xf32, #tpu.memory_space<smem>>
    %26 = vector.extract_strided_slice %0 {offsets = [5, 0], sizes = [1, 128], strides = [1, 1]} : vector<11x128xf32> to vector<1x128xf32>
    %27 = vector.broadcast %25 : f32 to vector<1x128xf32>
    %28 = arith.mulf %27, %26 : vector<1x128xf32>
    %29 = arith.addf %24, %28 : vector<1x128xf32>
    %c6 = arith.constant 6 : index
    %c0_8 = arith.constant 0 : index
    %30 = memref.load %arg1[%c6, %c0_8] : memref<11x6xf32, #tpu.memory_space<smem>>
    %31 = vector.extract_strided_slice %0 {offsets = [6, 0], sizes = [1, 128], strides = [1, 1]} : vector<11x128xf32> to vector<1x128xf32>
    %32 = vector.broadcast %30 : f32 to vector<1x128xf32>
    %33 = arith.mulf %32, %31 : vector<1x128xf32>
    %34 = arith.addf %29, %33 : vector<1x128xf32>
    %c7 = arith.constant 7 : index
    %c0_9 = arith.constant 0 : index
    %35 = memref.load %arg1[%c7, %c0_9] : memref<11x6xf32, #tpu.memory_space<smem>>
    %36 = vector.extract_strided_slice %0 {offsets = [7, 0], sizes = [1, 128], strides = [1, 1]} : vector<11x128xf32> to vector<1x128xf32>
    %37 = vector.broadcast %35 : f32 to vector<1x128xf32>
    %38 = arith.mulf %37, %36 : vector<1x128xf32>
    %39 = arith.addf %34, %38 : vector<1x128xf32>
    %c8 = arith.constant 8 : index
    %c0_10 = arith.constant 0 : index
    %40 = memref.load %arg1[%c8, %c0_10] : memref<11x6xf32, #tpu.memory_space<smem>>
    %41 = vector.extract_strided_slice %0 {offsets = [8, 0], sizes = [1, 128], strides = [1, 1]} : vector<11x128xf32> to vector<1x128xf32>
    %42 = vector.broadcast %40 : f32 to vector<1x128xf32>
    %43 = arith.mulf %42, %41 : vector<1x128xf32>
    %44 = arith.addf %39, %43 : vector<1x128xf32>
    %c9 = arith.constant 9 : index
    %c0_11 = arith.constant 0 : index
    %45 = memref.load %arg1[%c9, %c0_11] : memref<11x6xf32, #tpu.memory_space<smem>>
    %46 = vector.extract_strided_slice %0 {offsets = [9, 0], sizes = [1, 128], strides = [1, 1]} : vector<11x128xf32> to vector<1x128xf32>
    %47 = vector.broadcast %45 : f32 to vector<1x128xf32>
    %48 = arith.mulf %47, %46 : vector<1x128xf32>
    %49 = arith.addf %44, %48 : vector<1x128xf32>
    %c10 = arith.constant 10 : index
    %c0_12 = arith.constant 0 : index
    %50 = memref.load %arg1[%c10, %c0_12] : memref<11x6xf32, #tpu.memory_space<smem>>
    %51 = vector.extract_strided_slice %0 {offsets = [10, 0], sizes = [1, 128], strides = [1, 1]} : vector<11x128xf32> to vector<1x128xf32>
    %52 = vector.broadcast %50 : f32 to vector<1x128xf32>
    %53 = arith.mulf %52, %51 : vector<1x128xf32>
    %54 = arith.addf %49, %53 : vector<1x128xf32>
    %c0_13 = arith.constant 0 : index
    %55 = memref.load %arg2[%c0_13] : memref<6xf32, #tpu.memory_space<smem>>
    %56 = vector.broadcast %55 : f32 to vector<1x128xf32>
    %57 = arith.addf %54, %56 : vector<1x128xf32>
    %cst = arith.constant 0.000000e+00 : f32
    %58 = vector.broadcast %cst : f32 to vector<1x128xf32>
    %59 = arith.maximumf %57, %58 : vector<1x128xf32>
    %c0_14 = arith.constant 0 : index
    %c1_15 = arith.constant 1 : index
    %60 = memref.load %arg1[%c0_14, %c1_15] : memref<11x6xf32, #tpu.memory_space<smem>>
    %61 = vector.extract_strided_slice %0 {offsets = [0, 0], sizes = [1, 128], strides = [1, 1]} : vector<11x128xf32> to vector<1x128xf32>
    %62 = vector.broadcast %60 : f32 to vector<1x128xf32>
    %63 = arith.mulf %62, %61 : vector<1x128xf32>
    %c1_16 = arith.constant 1 : index
    %c1_17 = arith.constant 1 : index
    %64 = memref.load %arg1[%c1_16, %c1_17] : memref<11x6xf32, #tpu.memory_space<smem>>
    %65 = vector.extract_strided_slice %0 {offsets = [1, 0], sizes = [1, 128], strides = [1, 1]} : vector<11x128xf32> to vector<1x128xf32>
    %66 = vector.broadcast %64 : f32 to vector<1x128xf32>
    %67 = arith.mulf %66, %65 : vector<1x128xf32>
    %68 = arith.addf %63, %67 : vector<1x128xf32>
    %c2_18 = arith.constant 2 : index
    %c1_19 = arith.constant 1 : index
    %69 = memref.load %arg1[%c2_18, %c1_19] : memref<11x6xf32, #tpu.memory_space<smem>>
    %70 = vector.extract_strided_slice %0 {offsets = [2, 0], sizes = [1, 128], strides = [1, 1]} : vector<11x128xf32> to vector<1x128xf32>
    %71 = vector.broadcast %69 : f32 to vector<1x128xf32>
    %72 = arith.mulf %71, %70 : vector<1x128xf32>
    %73 = arith.addf %68, %72 : vector<1x128xf32>
    %c3_20 = arith.constant 3 : index
    %c1_21 = arith.constant 1 : index
    %74 = memref.load %arg1[%c3_20, %c1_21] : memref<11x6xf32, #tpu.memory_space<smem>>
    %75 = vector.extract_strided_slice %0 {offsets = [3, 0], sizes = [1, 128], strides = [1, 1]} : vector<11x128xf32> to vector<1x128xf32>
    %76 = vector.broadcast %74 : f32 to vector<1x128xf32>
    %77 = arith.mulf %76, %75 : vector<1x128xf32>
    %78 = arith.addf %73, %77 : vector<1x128xf32>
    %c4_22 = arith.constant 4 : index
    %c1_23 = arith.constant 1 : index
    %79 = memref.load %arg1[%c4_22, %c1_23] : memref<11x6xf32, #tpu.memory_space<smem>>
    %80 = vector.extract_strided_slice %0 {offsets = [4, 0], sizes = [1, 128], strides = [1, 1]} : vector<11x128xf32> to vector<1x128xf32>
    %81 = vector.broadcast %79 : f32 to vector<1x128xf32>
    %82 = arith.mulf %81, %80 : vector<1x128xf32>
    %83 = arith.addf %78, %82 : vector<1x128xf32>
    %c5_24 = arith.constant 5 : index
    %c1_25 = arith.constant 1 : index
    %84 = memref.load %arg1[%c5_24, %c1_25] : memref<11x6xf32, #tpu.memory_space<smem>>
    %85 = vector.extract_strided_slice %0 {offsets = [5, 0], sizes = [1, 128], strides = [1, 1]} : vector<11x128xf32> to vector<1x128xf32>
    %86 = vector.broadcast %84 : f32 to vector<1x128xf32>
    %87 = arith.mulf %86, %85 : vector<1x128xf32>
    %88 = arith.addf %83, %87 : vector<1x128xf32>
    %c6_26 = arith.constant 6 : index
    %c1_27 = arith.constant 1 : index
    %89 = memref.load %arg1[%c6_26, %c1_27] : memref<11x6xf32, #tpu.memory_space<smem>>
    %90 = vector.extract_strided_slice %0 {offsets = [6, 0], sizes = [1, 128], strides = [1, 1]} : vector<11x128xf32> to vector<1x128xf32>
    %91 = vector.broadcast %89 : f32 to vector<1x128xf32>
    %92 = arith.mulf %91, %90 : vector<1x128xf32>
    %93 = arith.addf %88, %92 : vector<1x128xf32>
    %c7_28 = arith.constant 7 : index
    %c1_29 = arith.constant 1 : index
    %94 = memref.load %arg1[%c7_28, %c1_29] : memref<11x6xf32, #tpu.memory_space<smem>>
    %95 = vector.extract_strided_slice %0 {offsets = [7, 0], sizes = [1, 128], strides = [1, 1]} : vector<11x128xf32> to vector<1x128xf32>
    %96 = vector.broadcast %94 : f32 to vector<1x128xf32>
    %97 = arith.mulf %96, %95 : vector<1x128xf32>
    %98 = arith.addf %93, %97 : vector<1x128xf32>
    %c8_30 = arith.constant 8 : index
    %c1_31 = arith.constant 1 : index
    %99 = memref.load %arg1[%c8_30, %c1_31] : memref<11x6xf32, #tpu.memory_space<smem>>
    %100 = vector.extract_strided_slice %0 {offsets = [8, 0], sizes = [1, 128], strides = [1, 1]} : vector<11x128xf32> to vector<1x128xf32>
    %101 = vector.broadcast %99 : f32 to vector<1x128xf32>
    %102 = arith.mulf %101, %100 : vector<1x128xf32>
    %103 = arith.addf %98, %102 : vector<1x128xf32>
    %c9_32 = arith.constant 9 : index
    %c1_33 = arith.constant 1 : index
    %104 = memref.load %arg1[%c9_32, %c1_33] : memref<11x6xf32, #tpu.memory_space<smem>>
    %105 = vector.extract_strided_slice %0 {offsets = [9, 0], sizes = [1, 128], strides = [1, 1]} : vector<11x128xf32> to vector<1x128xf32>
    %106 = vector.broadcast %104 : f32 to vector<1x128xf32>
    %107 = arith.mulf %106, %105 : vector<1x128xf32>
    %108 = arith.addf %103, %107 : vector<1x128xf32>
    %c10_34 = arith.constant 10 : index
    %c1_35 = arith.constant 1 : index
    %109 = memref.load %arg1[%c10_34, %c1_35] : memref<11x6xf32, #tpu.memory_space<smem>>
    %110 = vector.extract_strided_slice %0 {offsets = [10, 0], sizes = [1, 128], strides = [1, 1]} : vector<11x128xf32> to vector<1x128xf32>
    %111 = vector.broadcast %109 : f32 to vector<1x128xf32>
    %112 = arith.mulf %111, %110 : vector<1x128xf32>
    %113 = arith.addf %108, %112 : vector<1x128xf32>
    %c1_36 = arith.constant 1 : index
    %114 = memref.load %arg2[%c1_36] : memref<6xf32, #tpu.memory_space<smem>>
    %115 = vector.broadcast %114 : f32 to vector<1x128xf32>
    %116 = arith.addf %113, %115 : vector<1x128xf32>
    %cst_37 = arith.constant 0.000000e+00 : f32
    %117 = vector.broadcast %cst_37 : f32 to vector<1x128xf32>
    %118 = arith.maximumf %116, %117 : vector<1x128xf32>
    %c0_38 = arith.constant 0 : index
    %c2_39 = arith.constant 2 : index
    %119 = memref.load %arg1[%c0_38, %c2_39] : memref<11x6xf32, #tpu.memory_space<smem>>
    %120 = vector.extract_strided_slice %0 {offsets = [0, 0], sizes = [1, 128], strides = [1, 1]} : vector<11x128xf32> to vector<1x128xf32>
    %121 = vector.broadcast %119 : f32 to vector<1x128xf32>
    %122 = arith.mulf %121, %120 : vector<1x128xf32>
    %c1_40 = arith.constant 1 : index
    %c2_41 = arith.constant 2 : index
    %123 = memref.load %arg1[%c1_40, %c2_41] : memref<11x6xf32, #tpu.memory_space<smem>>
    %124 = vector.extract_strided_slice %0 {offsets = [1, 0], sizes = [1, 128], strides = [1, 1]} : vector<11x128xf32> to vector<1x128xf32>
    %125 = vector.broadcast %123 : f32 to vector<1x128xf32>
    %126 = arith.mulf %125, %124 : vector<1x128xf32>
    %127 = arith.addf %122, %126 : vector<1x128xf32>
    %c2_42 = arith.constant 2 : index
    %c2_43 = arith.constant 2 : index
    %128 = memref.load %arg1[%c2_42, %c2_43] : memref<11x6xf32, #tpu.memory_space<smem>>
    %129 = vector.extract_strided_slice %0 {offsets = [2, 0], sizes = [1, 128], strides = [1, 1]} : vector<11x128xf32> to vector<1x128xf32>
    %130 = vector.broadcast %128 : f32 to vector<1x128xf32>
    %131 = arith.mulf %130, %129 : vector<1x128xf32>
    %132 = arith.addf %127, %131 : vector<1x128xf32>
    %c3_44 = arith.constant 3 : index
    %c2_45 = arith.constant 2 : index
    %133 = memref.load %arg1[%c3_44, %c2_45] : memref<11x6xf32, #tpu.memory_space<smem>>
    %134 = vector.extract_strided_slice %0 {offsets = [3, 0], sizes = [1, 128], strides = [1, 1]} : vector<11x128xf32> to vector<1x128xf32>
    %135 = vector.broadcast %133 : f32 to vector<1x128xf32>
    %136 = arith.mulf %135, %134 : vector<1x128xf32>
    %137 = arith.addf %132, %136 : vector<1x128xf32>
    %c4_46 = arith.constant 4 : index
    %c2_47 = arith.constant 2 : index
    %138 = memref.load %arg1[%c4_46, %c2_47] : memref<11x6xf32, #tpu.memory_space<smem>>
    %139 = vector.extract_strided_slice %0 {offsets = [4, 0], sizes = [1, 128], strides = [1, 1]} : vector<11x128xf32> to vector<1x128xf32>
    %140 = vector.broadcast %138 : f32 to vector<1x128xf32>
    %141 = arith.mulf %140, %139 : vector<1x128xf32>
    %142 = arith.addf %137, %141 : vector<1x128xf32>
    %c5_48 = arith.constant 5 : index
    %c2_49 = arith.constant 2 : index
    %143 = memref.load %arg1[%c5_48, %c2_49] : memref<11x6xf32, #tpu.memory_space<smem>>
    %144 = vector.extract_strided_slice %0 {offsets = [5, 0], sizes = [1, 128], strides = [1, 1]} : vector<11x128xf32> to vector<1x128xf32>
    %145 = vector.broadcast %143 : f32 to vector<1x128xf32>
    %146 = arith.mulf %145, %144 : vector<1x128xf32>
    %147 = arith.addf %142, %146 : vector<1x128xf32>
    %c6_50 = arith.constant 6 : index
    %c2_51 = arith.constant 2 : index
    %148 = memref.load %arg1[%c6_50, %c2_51] : memref<11x6xf32, #tpu.memory_space<smem>>
    %149 = vector.extract_strided_slice %0 {offsets = [6, 0], sizes = [1, 128], strides = [1, 1]} : vector<11x128xf32> to vector<1x128xf32>
    %150 = vector.broadcast %148 : f32 to vector<1x128xf32>
    %151 = arith.mulf %150, %149 : vector<1x128xf32>
    %152 = arith.addf %147, %151 : vector<1x128xf32>
    %c7_52 = arith.constant 7 : index
    %c2_53 = arith.constant 2 : index
    %153 = memref.load %arg1[%c7_52, %c2_53] : memref<11x6xf32, #tpu.memory_space<smem>>
    %154 = vector.extract_strided_slice %0 {offsets = [7, 0], sizes = [1, 128], strides = [1, 1]} : vector<11x128xf32> to vector<1x128xf32>
    %155 = vector.broadcast %153 : f32 to vector<1x128xf32>
    %156 = arith.mulf %155, %154 : vector<1x128xf32>
    %157 = arith.addf %152, %156 : vector<1x128xf32>
    %c8_54 = arith.constant 8 : index
    %c2_55 = arith.constant 2 : index
    %158 = memref.load %arg1[%c8_54, %c2_55] : memref<11x6xf32, #tpu.memory_space<smem>>
    %159 = vector.extract_strided_slice %0 {offsets = [8, 0], sizes = [1, 128], strides = [1, 1]} : vector<11x128xf32> to vector<1x128xf32>
    %160 = vector.broadcast %158 : f32 to vector<1x128xf32>
    %161 = arith.mulf %160, %159 : vector<1x128xf32>
    %162 = arith.addf %157, %161 : vector<1x128xf32>
    %c9_56 = arith.constant 9 : index
    %c2_57 = arith.constant 2 : index
    %163 = memref.load %arg1[%c9_56, %c2_57] : memref<11x6xf32, #tpu.memory_space<smem>>
    %164 = vector.extract_strided_slice %0 {offsets = [9, 0], sizes = [1, 128], strides = [1, 1]} : vector<11x128xf32> to vector<1x128xf32>
    %165 = vector.broadcast %163 : f32 to vector<1x128xf32>
    %166 = arith.mulf %165, %164 : vector<1x128xf32>
    %167 = arith.addf %162, %166 : vector<1x128xf32>
    %c10_58 = arith.constant 10 : index
    %c2_59 = arith.constant 2 : index
    %168 = memref.load %arg1[%c10_58, %c2_59] : memref<11x6xf32, #tpu.memory_space<smem>>
    %169 = vector.extract_strided_slice %0 {offsets = [10, 0], sizes = [1, 128], strides = [1, 1]} : vector<11x128xf32> to vector<1x128xf32>
    %170 = vector.broadcast %168 : f32 to vector<1x128xf32>
    %171 = arith.mulf %170, %169 : vector<1x128xf32>
    %172 = arith.addf %167, %171 : vector<1x128xf32>
    %c2_60 = arith.constant 2 : index
    %173 = memref.load %arg2[%c2_60] : memref<6xf32, #tpu.memory_space<smem>>
    %174 = vector.broadcast %173 : f32 to vector<1x128xf32>
    %175 = arith.addf %172, %174 : vector<1x128xf32>
    %cst_61 = arith.constant 0.000000e+00 : f32
    %176 = vector.broadcast %cst_61 : f32 to vector<1x128xf32>
    %177 = arith.maximumf %175, %176 : vector<1x128xf32>
    %c0_62 = arith.constant 0 : index
    %c3_63 = arith.constant 3 : index
    %178 = memref.load %arg1[%c0_62, %c3_63] : memref<11x6xf32, #tpu.memory_space<smem>>
    %179 = vector.extract_strided_slice %0 {offsets = [0, 0], sizes = [1, 128], strides = [1, 1]} : vector<11x128xf32> to vector<1x128xf32>
    %180 = vector.broadcast %178 : f32 to vector<1x128xf32>
    %181 = arith.mulf %180, %179 : vector<1x128xf32>
    %c1_64 = arith.constant 1 : index
    %c3_65 = arith.constant 3 : index
    %182 = memref.load %arg1[%c1_64, %c3_65] : memref<11x6xf32, #tpu.memory_space<smem>>
    %183 = vector.extract_strided_slice %0 {offsets = [1, 0], sizes = [1, 128], strides = [1, 1]} : vector<11x128xf32> to vector<1x128xf32>
    %184 = vector.broadcast %182 : f32 to vector<1x128xf32>
    %185 = arith.mulf %184, %183 : vector<1x128xf32>
    %186 = arith.addf %181, %185 : vector<1x128xf32>
    %c2_66 = arith.constant 2 : index
    %c3_67 = arith.constant 3 : index
    %187 = memref.load %arg1[%c2_66, %c3_67] : memref<11x6xf32, #tpu.memory_space<smem>>
    %188 = vector.extract_strided_slice %0 {offsets = [2, 0], sizes = [1, 128], strides = [1, 1]} : vector<11x128xf32> to vector<1x128xf32>
    %189 = vector.broadcast %187 : f32 to vector<1x128xf32>
    %190 = arith.mulf %189, %188 : vector<1x128xf32>
    %191 = arith.addf %186, %190 : vector<1x128xf32>
    %c3_68 = arith.constant 3 : index
    %c3_69 = arith.constant 3 : index
    %192 = memref.load %arg1[%c3_68, %c3_69] : memref<11x6xf32, #tpu.memory_space<smem>>
    %193 = vector.extract_strided_slice %0 {offsets = [3, 0], sizes = [1, 128], strides = [1, 1]} : vector<11x128xf32> to vector<1x128xf32>
    %194 = vector.broadcast %192 : f32 to vector<1x128xf32>
    %195 = arith.mulf %194, %193 : vector<1x128xf32>
    %196 = arith.addf %191, %195 : vector<1x128xf32>
    %c4_70 = arith.constant 4 : index
    %c3_71 = arith.constant 3 : index
    %197 = memref.load %arg1[%c4_70, %c3_71] : memref<11x6xf32, #tpu.memory_space<smem>>
    %198 = vector.extract_strided_slice %0 {offsets = [4, 0], sizes = [1, 128], strides = [1, 1]} : vector<11x128xf32> to vector<1x128xf32>
    %199 = vector.broadcast %197 : f32 to vector<1x128xf32>
    %200 = arith.mulf %199, %198 : vector<1x128xf32>
    %201 = arith.addf %196, %200 : vector<1x128xf32>
    %c5_72 = arith.constant 5 : index
    %c3_73 = arith.constant 3 : index
    %202 = memref.load %arg1[%c5_72, %c3_73] : memref<11x6xf32, #tpu.memory_space<smem>>
    %203 = vector.extract_strided_slice %0 {offsets = [5, 0], sizes = [1, 128], strides = [1, 1]} : vector<11x128xf32> to vector<1x128xf32>
    %204 = vector.broadcast %202 : f32 to vector<1x128xf32>
    %205 = arith.mulf %204, %203 : vector<1x128xf32>
    %206 = arith.addf %201, %205 : vector<1x128xf32>
    %c6_74 = arith.constant 6 : index
    %c3_75 = arith.constant 3 : index
    %207 = memref.load %arg1[%c6_74, %c3_75] : memref<11x6xf32, #tpu.memory_space<smem>>
    %208 = vector.extract_strided_slice %0 {offsets = [6, 0], sizes = [1, 128], strides = [1, 1]} : vector<11x128xf32> to vector<1x128xf32>
    %209 = vector.broadcast %207 : f32 to vector<1x128xf32>
    %210 = arith.mulf %209, %208 : vector<1x128xf32>
    %211 = arith.addf %206, %210 : vector<1x128xf32>
    %c7_76 = arith.constant 7 : index
    %c3_77 = arith.constant 3 : index
    %212 = memref.load %arg1[%c7_76, %c3_77] : memref<11x6xf32, #tpu.memory_space<smem>>
    %213 = vector.extract_strided_slice %0 {offsets = [7, 0], sizes = [1, 128], strides = [1, 1]} : vector<11x128xf32> to vector<1x128xf32>
    %214 = vector.broadcast %212 : f32 to vector<1x128xf32>
    %215 = arith.mulf %214, %213 : vector<1x128xf32>
    %216 = arith.addf %211, %215 : vector<1x128xf32>
    %c8_78 = arith.constant 8 : index
    %c3_79 = arith.constant 3 : index
    %217 = memref.load %arg1[%c8_78, %c3_79] : memref<11x6xf32, #tpu.memory_space<smem>>
    %218 = vector.extract_strided_slice %0 {offsets = [8, 0], sizes = [1, 128], strides = [1, 1]} : vector<11x128xf32> to vector<1x128xf32>
    %219 = vector.broadcast %217 : f32 to vector<1x128xf32>
    %220 = arith.mulf %219, %218 : vector<1x128xf32>
    %221 = arith.addf %216, %220 : vector<1x128xf32>
    %c9_80 = arith.constant 9 : index
    %c3_81 = arith.constant 3 : index
    %222 = memref.load %arg1[%c9_80, %c3_81] : memref<11x6xf32, #tpu.memory_space<smem>>
    %223 = vector.extract_strided_slice %0 {offsets = [9, 0], sizes = [1, 128], strides = [1, 1]} : vector<11x128xf32> to vector<1x128xf32>
    %224 = vector.broadcast %222 : f32 to vector<1x128xf32>
    %225 = arith.mulf %224, %223 : vector<1x128xf32>
    %226 = arith.addf %221, %225 : vector<1x128xf32>
    %c10_82 = arith.constant 10 : index
    %c3_83 = arith.constant 3 : index
    %227 = memref.load %arg1[%c10_82, %c3_83] : memref<11x6xf32, #tpu.memory_space<smem>>
    %228 = vector.extract_strided_slice %0 {offsets = [10, 0], sizes = [1, 128], strides = [1, 1]} : vector<11x128xf32> to vector<1x128xf32>
    %229 = vector.broadcast %227 : f32 to vector<1x128xf32>
    %230 = arith.mulf %229, %228 : vector<1x128xf32>
    %231 = arith.addf %226, %230 : vector<1x128xf32>
    %c3_84 = arith.constant 3 : index
    %232 = memref.load %arg2[%c3_84] : memref<6xf32, #tpu.memory_space<smem>>
    %233 = vector.broadcast %232 : f32 to vector<1x128xf32>
    %234 = arith.addf %231, %233 : vector<1x128xf32>
    %cst_85 = arith.constant 0.000000e+00 : f32
    %235 = vector.broadcast %cst_85 : f32 to vector<1x128xf32>
    %236 = arith.maximumf %234, %235 : vector<1x128xf32>
    %c0_86 = arith.constant 0 : index
    %c4_87 = arith.constant 4 : index
    %237 = memref.load %arg1[%c0_86, %c4_87] : memref<11x6xf32, #tpu.memory_space<smem>>
    %238 = vector.extract_strided_slice %0 {offsets = [0, 0], sizes = [1, 128], strides = [1, 1]} : vector<11x128xf32> to vector<1x128xf32>
    %239 = vector.broadcast %237 : f32 to vector<1x128xf32>
    %240 = arith.mulf %239, %238 : vector<1x128xf32>
    %c1_88 = arith.constant 1 : index
    %c4_89 = arith.constant 4 : index
    %241 = memref.load %arg1[%c1_88, %c4_89] : memref<11x6xf32, #tpu.memory_space<smem>>
    %242 = vector.extract_strided_slice %0 {offsets = [1, 0], sizes = [1, 128], strides = [1, 1]} : vector<11x128xf32> to vector<1x128xf32>
    %243 = vector.broadcast %241 : f32 to vector<1x128xf32>
    %244 = arith.mulf %243, %242 : vector<1x128xf32>
    %245 = arith.addf %240, %244 : vector<1x128xf32>
    %c2_90 = arith.constant 2 : index
    %c4_91 = arith.constant 4 : index
    %246 = memref.load %arg1[%c2_90, %c4_91] : memref<11x6xf32, #tpu.memory_space<smem>>
    %247 = vector.extract_strided_slice %0 {offsets = [2, 0], sizes = [1, 128], strides = [1, 1]} : vector<11x128xf32> to vector<1x128xf32>
    %248 = vector.broadcast %246 : f32 to vector<1x128xf32>
    %249 = arith.mulf %248, %247 : vector<1x128xf32>
    %250 = arith.addf %245, %249 : vector<1x128xf32>
    %c3_92 = arith.constant 3 : index
    %c4_93 = arith.constant 4 : index
    %251 = memref.load %arg1[%c3_92, %c4_93] : memref<11x6xf32, #tpu.memory_space<smem>>
    %252 = vector.extract_strided_slice %0 {offsets = [3, 0], sizes = [1, 128], strides = [1, 1]} : vector<11x128xf32> to vector<1x128xf32>
    %253 = vector.broadcast %251 : f32 to vector<1x128xf32>
    %254 = arith.mulf %253, %252 : vector<1x128xf32>
    %255 = arith.addf %250, %254 : vector<1x128xf32>
    %c4_94 = arith.constant 4 : index
    %c4_95 = arith.constant 4 : index
    %256 = memref.load %arg1[%c4_94, %c4_95] : memref<11x6xf32, #tpu.memory_space<smem>>
    %257 = vector.extract_strided_slice %0 {offsets = [4, 0], sizes = [1, 128], strides = [1, 1]} : vector<11x128xf32> to vector<1x128xf32>
    %258 = vector.broadcast %256 : f32 to vector<1x128xf32>
    %259 = arith.mulf %258, %257 : vector<1x128xf32>
    %260 = arith.addf %255, %259 : vector<1x128xf32>
    %c5_96 = arith.constant 5 : index
    %c4_97 = arith.constant 4 : index
    %261 = memref.load %arg1[%c5_96, %c4_97] : memref<11x6xf32, #tpu.memory_space<smem>>
    %262 = vector.extract_strided_slice %0 {offsets = [5, 0], sizes = [1, 128], strides = [1, 1]} : vector<11x128xf32> to vector<1x128xf32>
    %263 = vector.broadcast %261 : f32 to vector<1x128xf32>
    %264 = arith.mulf %263, %262 : vector<1x128xf32>
    %265 = arith.addf %260, %264 : vector<1x128xf32>
    %c6_98 = arith.constant 6 : index
    %c4_99 = arith.constant 4 : index
    %266 = memref.load %arg1[%c6_98, %c4_99] : memref<11x6xf32, #tpu.memory_space<smem>>
    %267 = vector.extract_strided_slice %0 {offsets = [6, 0], sizes = [1, 128], strides = [1, 1]} : vector<11x128xf32> to vector<1x128xf32>
    %268 = vector.broadcast %266 : f32 to vector<1x128xf32>
    %269 = arith.mulf %268, %267 : vector<1x128xf32>
    %270 = arith.addf %265, %269 : vector<1x128xf32>
    %c7_100 = arith.constant 7 : index
    %c4_101 = arith.constant 4 : index
    %271 = memref.load %arg1[%c7_100, %c4_101] : memref<11x6xf32, #tpu.memory_space<smem>>
    %272 = vector.extract_strided_slice %0 {offsets = [7, 0], sizes = [1, 128], strides = [1, 1]} : vector<11x128xf32> to vector<1x128xf32>
    %273 = vector.broadcast %271 : f32 to vector<1x128xf32>
    %274 = arith.mulf %273, %272 : vector<1x128xf32>
    %275 = arith.addf %270, %274 : vector<1x128xf32>
    %c8_102 = arith.constant 8 : index
    %c4_103 = arith.constant 4 : index
    %276 = memref.load %arg1[%c8_102, %c4_103] : memref<11x6xf32, #tpu.memory_space<smem>>
    %277 = vector.extract_strided_slice %0 {offsets = [8, 0], sizes = [1, 128], strides = [1, 1]} : vector<11x128xf32> to vector<1x128xf32>
    %278 = vector.broadcast %276 : f32 to vector<1x128xf32>
    %279 = arith.mulf %278, %277 : vector<1x128xf32>
    %280 = arith.addf %275, %279 : vector<1x128xf32>
    %c9_104 = arith.constant 9 : index
    %c4_105 = arith.constant 4 : index
    %281 = memref.load %arg1[%c9_104, %c4_105] : memref<11x6xf32, #tpu.memory_space<smem>>
    %282 = vector.extract_strided_slice %0 {offsets = [9, 0], sizes = [1, 128], strides = [1, 1]} : vector<11x128xf32> to vector<1x128xf32>
    %283 = vector.broadcast %281 : f32 to vector<1x128xf32>
    %284 = arith.mulf %283, %282 : vector<1x128xf32>
    %285 = arith.addf %280, %284 : vector<1x128xf32>
    %c10_106 = arith.constant 10 : index
    %c4_107 = arith.constant 4 : index
    %286 = memref.load %arg1[%c10_106, %c4_107] : memref<11x6xf32, #tpu.memory_space<smem>>
    %287 = vector.extract_strided_slice %0 {offsets = [10, 0], sizes = [1, 128], strides = [1, 1]} : vector<11x128xf32> to vector<1x128xf32>
    %288 = vector.broadcast %286 : f32 to vector<1x128xf32>
    %289 = arith.mulf %288, %287 : vector<1x128xf32>
    %290 = arith.addf %285, %289 : vector<1x128xf32>
    %c4_108 = arith.constant 4 : index
    %291 = memref.load %arg2[%c4_108] : memref<6xf32, #tpu.memory_space<smem>>
    %292 = vector.broadcast %291 : f32 to vector<1x128xf32>
    %293 = arith.addf %290, %292 : vector<1x128xf32>
    %cst_109 = arith.constant 0.000000e+00 : f32
    %294 = vector.broadcast %cst_109 : f32 to vector<1x128xf32>
    %295 = arith.maximumf %293, %294 : vector<1x128xf32>
    %c0_110 = arith.constant 0 : index
    %c5_111 = arith.constant 5 : index
    %296 = memref.load %arg1[%c0_110, %c5_111] : memref<11x6xf32, #tpu.memory_space<smem>>
    %297 = vector.extract_strided_slice %0 {offsets = [0, 0], sizes = [1, 128], strides = [1, 1]} : vector<11x128xf32> to vector<1x128xf32>
    %298 = vector.broadcast %296 : f32 to vector<1x128xf32>
    %299 = arith.mulf %298, %297 : vector<1x128xf32>
    %c1_112 = arith.constant 1 : index
    %c5_113 = arith.constant 5 : index
    %300 = memref.load %arg1[%c1_112, %c5_113] : memref<11x6xf32, #tpu.memory_space<smem>>
    %301 = vector.extract_strided_slice %0 {offsets = [1, 0], sizes = [1, 128], strides = [1, 1]} : vector<11x128xf32> to vector<1x128xf32>
    %302 = vector.broadcast %300 : f32 to vector<1x128xf32>
    %303 = arith.mulf %302, %301 : vector<1x128xf32>
    %304 = arith.addf %299, %303 : vector<1x128xf32>
    %c2_114 = arith.constant 2 : index
    %c5_115 = arith.constant 5 : index
    %305 = memref.load %arg1[%c2_114, %c5_115] : memref<11x6xf32, #tpu.memory_space<smem>>
    %306 = vector.extract_strided_slice %0 {offsets = [2, 0], sizes = [1, 128], strides = [1, 1]} : vector<11x128xf32> to vector<1x128xf32>
    %307 = vector.broadcast %305 : f32 to vector<1x128xf32>
    %308 = arith.mulf %307, %306 : vector<1x128xf32>
    %309 = arith.addf %304, %308 : vector<1x128xf32>
    %c3_116 = arith.constant 3 : index
    %c5_117 = arith.constant 5 : index
    %310 = memref.load %arg1[%c3_116, %c5_117] : memref<11x6xf32, #tpu.memory_space<smem>>
    %311 = vector.extract_strided_slice %0 {offsets = [3, 0], sizes = [1, 128], strides = [1, 1]} : vector<11x128xf32> to vector<1x128xf32>
    %312 = vector.broadcast %310 : f32 to vector<1x128xf32>
    %313 = arith.mulf %312, %311 : vector<1x128xf32>
    %314 = arith.addf %309, %313 : vector<1x128xf32>
    %c4_118 = arith.constant 4 : index
    %c5_119 = arith.constant 5 : index
    %315 = memref.load %arg1[%c4_118, %c5_119] : memref<11x6xf32, #tpu.memory_space<smem>>
    %316 = vector.extract_strided_slice %0 {offsets = [4, 0], sizes = [1, 128], strides = [1, 1]} : vector<11x128xf32> to vector<1x128xf32>
    %317 = vector.broadcast %315 : f32 to vector<1x128xf32>
    %318 = arith.mulf %317, %316 : vector<1x128xf32>
    %319 = arith.addf %314, %318 : vector<1x128xf32>
    %c5_120 = arith.constant 5 : index
    %c5_121 = arith.constant 5 : index
    %320 = memref.load %arg1[%c5_120, %c5_121] : memref<11x6xf32, #tpu.memory_space<smem>>
    %321 = vector.extract_strided_slice %0 {offsets = [5, 0], sizes = [1, 128], strides = [1, 1]} : vector<11x128xf32> to vector<1x128xf32>
    %322 = vector.broadcast %320 : f32 to vector<1x128xf32>
    %323 = arith.mulf %322, %321 : vector<1x128xf32>
    %324 = arith.addf %319, %323 : vector<1x128xf32>
    %c6_122 = arith.constant 6 : index
    %c5_123 = arith.constant 5 : index
    %325 = memref.load %arg1[%c6_122, %c5_123] : memref<11x6xf32, #tpu.memory_space<smem>>
    %326 = vector.extract_strided_slice %0 {offsets = [6, 0], sizes = [1, 128], strides = [1, 1]} : vector<11x128xf32> to vector<1x128xf32>
    %327 = vector.broadcast %325 : f32 to vector<1x128xf32>
    %328 = arith.mulf %327, %326 : vector<1x128xf32>
    %329 = arith.addf %324, %328 : vector<1x128xf32>
    %c7_124 = arith.constant 7 : index
    %c5_125 = arith.constant 5 : index
    %330 = memref.load %arg1[%c7_124, %c5_125] : memref<11x6xf32, #tpu.memory_space<smem>>
    %331 = vector.extract_strided_slice %0 {offsets = [7, 0], sizes = [1, 128], strides = [1, 1]} : vector<11x128xf32> to vector<1x128xf32>
    %332 = vector.broadcast %330 : f32 to vector<1x128xf32>
    %333 = arith.mulf %332, %331 : vector<1x128xf32>
    %334 = arith.addf %329, %333 : vector<1x128xf32>
    %c8_126 = arith.constant 8 : index
    %c5_127 = arith.constant 5 : index
    %335 = memref.load %arg1[%c8_126, %c5_127] : memref<11x6xf32, #tpu.memory_space<smem>>
    %336 = vector.extract_strided_slice %0 {offsets = [8, 0], sizes = [1, 128], strides = [1, 1]} : vector<11x128xf32> to vector<1x128xf32>
    %337 = vector.broadcast %335 : f32 to vector<1x128xf32>
    %338 = arith.mulf %337, %336 : vector<1x128xf32>
    %339 = arith.addf %334, %338 : vector<1x128xf32>
    %c9_128 = arith.constant 9 : index
    %c5_129 = arith.constant 5 : index
    %340 = memref.load %arg1[%c9_128, %c5_129] : memref<11x6xf32, #tpu.memory_space<smem>>
    %341 = vector.extract_strided_slice %0 {offsets = [9, 0], sizes = [1, 128], strides = [1, 1]} : vector<11x128xf32> to vector<1x128xf32>
    %342 = vector.broadcast %340 : f32 to vector<1x128xf32>
    %343 = arith.mulf %342, %341 : vector<1x128xf32>
    %344 = arith.addf %339, %343 : vector<1x128xf32>
    %c10_130 = arith.constant 10 : index
    %c5_131 = arith.constant 5 : index
    %345 = memref.load %arg1[%c10_130, %c5_131] : memref<11x6xf32, #tpu.memory_space<smem>>
    %346 = vector.extract_strided_slice %0 {offsets = [10, 0], sizes = [1, 128], strides = [1, 1]} : vector<11x128xf32> to vector<1x128xf32>
    %347 = vector.broadcast %345 : f32 to vector<1x128xf32>
    %348 = arith.mulf %347, %346 : vector<1x128xf32>
    %349 = arith.addf %344, %348 : vector<1x128xf32>
    %c5_132 = arith.constant 5 : index
    %350 = memref.load %arg2[%c5_132] : memref<6xf32, #tpu.memory_space<smem>>
    %351 = vector.broadcast %350 : f32 to vector<1x128xf32>
    %352 = arith.addf %349, %351 : vector<1x128xf32>
    %cst_133 = arith.constant 0.000000e+00 : f32
    %353 = vector.broadcast %cst_133 : f32 to vector<1x128xf32>
    %354 = arith.maximumf %352, %353 : vector<1x128xf32>
    %c0_134 = arith.constant 0 : index
    %c0_135 = arith.constant 0 : index
    %355 = memref.load %arg3[%c0_134, %c0_135] : memref<6x2xf32, #tpu.memory_space<smem>>
    %356 = vector.broadcast %355 : f32 to vector<1x128xf32>
    %357 = arith.mulf %356, %59 : vector<1x128xf32>
    %c1_136 = arith.constant 1 : index
    %c0_137 = arith.constant 0 : index
    %358 = memref.load %arg3[%c1_136, %c0_137] : memref<6x2xf32, #tpu.memory_space<smem>>
    %359 = vector.broadcast %358 : f32 to vector<1x128xf32>
    %360 = arith.mulf %359, %118 : vector<1x128xf32>
    %361 = arith.addf %357, %360 : vector<1x128xf32>
    %c2_138 = arith.constant 2 : index
    %c0_139 = arith.constant 0 : index
    %362 = memref.load %arg3[%c2_138, %c0_139] : memref<6x2xf32, #tpu.memory_space<smem>>
    %363 = vector.broadcast %362 : f32 to vector<1x128xf32>
    %364 = arith.mulf %363, %177 : vector<1x128xf32>
    %365 = arith.addf %361, %364 : vector<1x128xf32>
    %c3_140 = arith.constant 3 : index
    %c0_141 = arith.constant 0 : index
    %366 = memref.load %arg3[%c3_140, %c0_141] : memref<6x2xf32, #tpu.memory_space<smem>>
    %367 = vector.broadcast %366 : f32 to vector<1x128xf32>
    %368 = arith.mulf %367, %236 : vector<1x128xf32>
    %369 = arith.addf %365, %368 : vector<1x128xf32>
    %c4_142 = arith.constant 4 : index
    %c0_143 = arith.constant 0 : index
    %370 = memref.load %arg3[%c4_142, %c0_143] : memref<6x2xf32, #tpu.memory_space<smem>>
    %371 = vector.broadcast %370 : f32 to vector<1x128xf32>
    %372 = arith.mulf %371, %295 : vector<1x128xf32>
    %373 = arith.addf %369, %372 : vector<1x128xf32>
    %c5_144 = arith.constant 5 : index
    %c0_145 = arith.constant 0 : index
    %374 = memref.load %arg3[%c5_144, %c0_145] : memref<6x2xf32, #tpu.memory_space<smem>>
    %375 = vector.broadcast %374 : f32 to vector<1x128xf32>
    %376 = arith.mulf %375, %354 : vector<1x128xf32>
    %377 = arith.addf %373, %376 : vector<1x128xf32>
    %c0_146 = arith.constant 0 : index
    %378 = memref.load %arg4[%c0_146] : memref<2xf32, #tpu.memory_space<smem>>
    %379 = vector.broadcast %378 : f32 to vector<1x128xf32>
    %380 = arith.addf %377, %379 : vector<1x128xf32>
    %cst_147 = arith.constant 5.000000e-01 : f32
    %381 = vector.broadcast %cst_147 : f32 to vector<1x128xf32>
    %382 = arith.mulf %381, %380 : vector<1x128xf32>
    %383 = math.tanh %382 : vector<1x128xf32>
    %c0_148 = arith.constant 0 : index
    %c0_149 = arith.constant 0 : index
    %384 = vector.load %arg6[%c0_148, %c0_149] : memref<2x128xf32, #tpu.memory_space<vmem>>, vector<1x128xf32>
    tpu.vector_store %arg6[%c0_148, %c0_149], %383 {strides = array<i32>} : memref<2x128xf32, #tpu.memory_space<vmem>>, vector<1x128xf32>,
    %c0_150 = arith.constant 0 : index
    %c1_151 = arith.constant 1 : index
    %385 = memref.load %arg3[%c0_150, %c1_151] : memref<6x2xf32, #tpu.memory_space<smem>>
    %386 = vector.broadcast %385 : f32 to vector<1x128xf32>
    %387 = arith.mulf %386, %59 : vector<1x128xf32>
    %c1_152 = arith.constant 1 : index
    %c1_153 = arith.constant 1 : index
    %388 = memref.load %arg3[%c1_152, %c1_153] : memref<6x2xf32, #tpu.memory_space<smem>>
    %389 = vector.broadcast %388 : f32 to vector<1x128xf32>
    %390 = arith.mulf %389, %118 : vector<1x128xf32>
    %391 = arith.addf %387, %390 : vector<1x128xf32>
    %c2_154 = arith.constant 2 : index
    %c1_155 = arith.constant 1 : index
    %392 = memref.load %arg3[%c2_154, %c1_155] : memref<6x2xf32, #tpu.memory_space<smem>>
    %393 = vector.broadcast %392 : f32 to vector<1x128xf32>
    %394 = arith.mulf %393, %177 : vector<1x128xf32>
    %395 = arith.addf %391, %394 : vector<1x128xf32>
    %c3_156 = arith.constant 3 : index
    %c1_157 = arith.constant 1 : index
    %396 = memref.load %arg3[%c3_156, %c1_157] : memref<6x2xf32, #tpu.memory_space<smem>>
    %397 = vector.broadcast %396 : f32 to vector<1x128xf32>
    %398 = arith.mulf %397, %236 : vector<1x128xf32>
    %399 = arith.addf %395, %398 : vector<1x128xf32>
    %c4_158 = arith.constant 4 : index
    %c1_159 = arith.constant 1 : index
    %400 = memref.load %arg3[%c4_158, %c1_159] : memref<6x2xf32, #tpu.memory_space<smem>>
    %401 = vector.broadcast %400 : f32 to vector<1x128xf32>
    %402 = arith.mulf %401, %295 : vector<1x128xf32>
    %403 = arith.addf %399, %402 : vector<1x128xf32>
    %c5_160 = arith.constant 5 : index
    %c1_161 = arith.constant 1 : index
    %404 = memref.load %arg3[%c5_160, %c1_161] : memref<6x2xf32, #tpu.memory_space<smem>>
    %405 = vector.broadcast %404 : f32 to vector<1x128xf32>
    %406 = arith.mulf %405, %354 : vector<1x128xf32>
    %407 = arith.addf %403, %406 : vector<1x128xf32>
    %c1_162 = arith.constant 1 : index
    %408 = memref.load %arg4[%c1_162] : memref<2xf32, #tpu.memory_space<smem>>
    %409 = vector.broadcast %408 : f32 to vector<1x128xf32>
    %410 = arith.addf %407, %409 : vector<1x128xf32>
    %cst_163 = arith.constant 5.000000e-01 : f32
    %411 = vector.broadcast %cst_163 : f32 to vector<1x128xf32>
    %412 = arith.mulf %411, %410 : vector<1x128xf32>
    %413 = math.tanh %412 : vector<1x128xf32>
    %c1_164 = arith.constant 1 : index
    %c0_165 = arith.constant 0 : index
    %414 = vector.load %arg6[%c1_164, %c0_165] : memref<2x128xf32, #tpu.memory_space<vmem>>, vector<1x128xf32>
    tpu.vector_store %arg6[%c1_164, %c0_165], %413 {strides = array<i32>} : memref<2x128xf32, #tpu.memory_space<vmem>>, vector<1x128xf32>,
    return
  }
  func.func @transform_0(%arg0: i32) -> (i32, i32) {
    %c0_i32 = arith.constant 0 : i32
    %c0_i32_0 = arith.constant 0 : i32
    %c0_i32_1 = arith.constant 0 : i32
    return %c0_i32, %c0_i32_0 : i32, i32
  }
  func.func @transform_1(%arg0: i32) -> i32 {
    %c0_i32 = arith.constant 0 : i32
    %c0_i32_0 = arith.constant 0 : i32
    return %c0_i32 : i32
  }
  func.func @transform_2(%arg0: i32) -> (i32, i32) {
    %c0_i32 = arith.constant 0 : i32
    %c0_i32_0 = arith.constant 0 : i32
    %c0_i32_1 = arith.constant 0 : i32
    return %c0_i32, %c0_i32_0 : i32, i32
  }
  func.func @transform_3(%arg0: i32) -> i32 {
    %c0_i32 = arith.constant 0 : i32
    %c0_i32_0 = arith.constant 0 : i32
    return %c0_i32 : i32
  }
  func.func @transform_4(%arg0: i32) -> (i32, i32) {
    %c0_i32 = arith.constant 0 : i32
    %c0_i32_0 = arith.constant 0 : i32
    return %c0_i32, %arg0 : i32, i32
  }
  func.func @transform_5(%arg0: i32) -> (i32, i32) {
    %c0_i32 = arith.constant 0 : i32
    %c0_i32_0 = arith.constant 0 : i32
    return %c0_i32, %arg0 : i32, i32
  }
}

</mosaic_0001>

<llo_original>
// kernel: net_forward.1
$region0: #{net_forward.1}
  #allocation0 [shape = 'u32[]', space=smem, size = 0x4, offset = 0x4, fixed_abs, tag = 'smem constant byte address 0x4 - core index']
  #allocation1 [shape = 'u32[144,128]{1,0:T(1,128)}', space=vmem, size = 0x12000, scoped, tag = 'internal scratch']
  %s0 = inlined_call_operand.vmem [shape: f32[11,6], index: 0, kind: input, shape index: {}]
  %s1 = inlined_call_operand.vmem [shape: f32[6], index: 1, kind: input, shape index: {}]
  %s2 = inlined_call_operand.vmem [shape: f32[6,2], index: 2, kind: input, shape index: {}]
  %s3 = inlined_call_operand.vmem [shape: f32[2], index: 3, kind: input, shape index: {}]
  %s4 = inlined_call_operand.vmem [shape: f32[11,128], index: 4, kind: input, shape index: {}]
  %s5 = inlined_call_operand.vmem [shape: f32[2,128], index: 5, kind: output, shape index: {}]
  %s6 = sld [smem:[#allocation0]]
  $region46: #{net_forward.1} parent=0
    _
  %s8 = ssub.s32 1, %s6
  %s9 = scalar_select 0, %s8, %s6
  $region1: #{net_forward.1} parent=0
    #allocation2 [shape = 'u8[8192]{0}', space=smem, size = 0x2000, scoped, tag = 'input window, operand 0, single buffered']
    #allocation3 [shape = 's32[1]{0}', space=sflag, size = 0x4, scoped, tag = 'scoped memory for net_forward.1']
    #allocation4 [shape = 'u8[512]{0}', space=smem, size = 0x200, scoped, tag = 'input window, operand 1, single buffered']
    #allocation5 [shape = 's32[1]{0}', space=sflag, size = 0x4, scoped, tag = 'scoped memory for net_forward.1']
    #allocation6 [shape = 'u8[4096]{0}', space=smem, size = 0x1000, scoped, tag = 'input window, operand 2, single buffered']
    #allocation7 [shape = 'u8[512]{0}', space=smem, size = 0x200, scoped, tag = 'input window, operand 3, single buffered']
    #allocation8 [shape = 's32[1]{0}', space=sflag, size = 0x4, scoped, tag = 'scoped memory for net_forward.1']
    %10 = vsyncpa [#allocation3], 0
    %11 = vsyncpa [#allocation5], 0
    %12 = vsyncpa [#allocation8], 0
    // Predicated region
    $region2: #{net_forward.1} parent=1 // pred_check
      _
    $region3: #{net_forward.1} parent=1 // pred_check_branch
      %14 = sbr.rel (0) target = $region5
    $region4: #{net_forward.1} parent=1 // pred_region
      %s16 = ssub.s32 256, 256
      %17 = vsyncadd [#allocation3], %s16
      %s18 = sshll.u32 %s0, 4
      %s19 = int_to_ptr.vmem [resolvable:$true] %s18
      %24 = dma.vmem_to_smem %s19, 256, [#allocation2], [#allocation3], 128, 128, 8
    $region5: #{net_forward.1} parent=1 // pred_fallthru
      _
    // Predicated region
    $region6: #{net_forward.1} parent=1 // pred_check
      _
    $region7: #{net_forward.1} parent=1 // pred_check_branch
      %26 = sbr.rel (0) target = $region9
    $region8: #{net_forward.1} parent=1 // pred_region
      %s28 = ssub.s32 16, 16
      %29 = vsyncadd [#allocation5], %s28
      %s31 = sshll.u32 %s1, 4
      %s32 = int_to_ptr.vmem [resolvable:$true] %s31
      %34 = dma.vmem_to_smem %s32, 16, [#allocation4], [#allocation5]
    $region9: #{net_forward.1} parent=1 // pred_fallthru
      _
    // Predicated region
    $region10: #{net_forward.1} parent=1 // pred_check
      _
    $region11: #{net_forward.1} parent=1 // pred_check_branch
      %36 = sbr.rel (0) target = $region13
    $region12: #{net_forward.1} parent=1 // pred_region
      %s38 = ssub.s32 128, 128
      %39 = vsyncadd [#allocation5], %s38
      %s41 = sshll.u32 %s2, 4
      %s42 = int_to_ptr.vmem [resolvable:$true] %s41
      %44 = dma.vmem_to_smem %s42, 128, [#allocation6], [#allocation5]
    $region13: #{net_forward.1} parent=1 // pred_fallthru
      _
    // Predicated region
    $region14: #{net_forward.1} parent=1 // pred_check
      _
    $region15: #{net_forward.1} parent=1 // pred_check_branch
      %46 = sbr.rel (0) target = $region17
    $region16: #{net_forward.1} parent=1 // pred_region
      %s48 = ssub.s32 16, 16
      %49 = vsyncadd [#allocation8], %s48
      %s51 = sshll.u32 %s3, 4
      %s52 = int_to_ptr.vmem [resolvable:$true] %s51
      %54 = dma.vmem_to_smem %s52, 16, [#allocation7], [#allocation8]
    $region17: #{net_forward.1} parent=1 // pred_fallthru
      _
    // Predicated region
    $region18: #{net_forward.1} parent=1 // pred_check
      _
    $region19: #{net_forward.1} parent=1 // pred_check_branch
      %56 = sbr.rel (0) target = $region21
    $region20: #{net_forward.1} parent=1 // pred_region
      _
    $region21: #{net_forward.1} parent=1 // pred_fallthru
      _
    // Predicated region
    $region22: #{net_forward.1} parent=1 // pred_check
      _
    $region23: #{net_forward.1} parent=1 // pred_check_branch
      %58 = sbr.rel (0) target = $region25
    $region24: #{net_forward.1} parent=1 // pred_region
      %59 = dma.done [#allocation3], 256
    $region25: #{net_forward.1} parent=1 // pred_fallthru
      _
    // Predicated region
    $region26: #{net_forward.1} parent=1 // pred_check
      _
    $region27: #{net_forward.1} parent=1 // pred_check_branch
      %61 = sbr.rel (0) target = $region29
    $region28: #{net_forward.1} parent=1 // pred_region
      %62 = dma.done [#allocation5], 16
    $region29: #{net_forward.1} parent=1 // pred_fallthru
      _
    // Predicated region
    $region30: #{net_forward.1} parent=1 // pred_check
      _
    $region31: #{net_forward.1} parent=1 // pred_check_branch
      %64 = sbr.rel (0) target = $region33
    $region32: #{net_forward.1} parent=1 // pred_region
      %65 = dma.done [#allocation5], 128
    $region33: #{net_forward.1} parent=1 // pred_fallthru
      _
    // Predicated region
    $region34: #{net_forward.1} parent=1 // pred_check
      _
    $region35: #{net_forward.1} parent=1 // pred_check_branch
      %67 = sbr.rel (0) target = $region37
    $region36: #{net_forward.1} parent=1 // pred_region
      %68 = dma.done [#allocation8], 16
    $region37: #{net_forward.1} parent=1 // pred_fallthru
      _
    %69 = sfence
    %v70 = vld [vmem:[%s4] sm:$0xff]
    %v71 = vld [vmem:[%s4 + $0x8] sm:$0x7]
    %s72 = sld [smem:[#allocation2]]
    %v73 = vstv %s72
    %v74 = vmul.f32 %v73, %v70
    %s75 = sld [smem:[#allocation2 + $0x80]]
    %v76 = vstv %s75
    %v77 = vmul.f32 %v76, %v70
    %v79 = vrot.slane %v77, 1
    %v81 = vadd.f32 %v74, %v79
    %s82 = sld [smem:[#allocation2 + $0x100]]
    %v83 = vstv %s82
    %v84 = vmul.f32 %v83, %v70
    %v86 = vrot.slane %v84, 2
    %v88 = vadd.f32 %v81, %v86
    %s89 = sld [smem:[#allocation2 + $0x180]]
    %v90 = vstv %s89
    %v91 = vmul.f32 %v90, %v70
    %v93 = vrot.slane %v91, 3
    %v95 = vadd.f32 %v88, %v93
    %s96 = sld [smem:[#allocation2 + $0x200]]
    %v97 = vstv %s96
    %v98 = vmul.f32 %v97, %v70
    %v100 = vrot.slane %v98, 4
    %v102 = vadd.f32 %v95, %v100
    %s103 = sld [smem:[#allocation2 + $0x280]]
    %v104 = vstv %s103
    %v105 = vmul.f32 %v104, %v70
    %v107 = vrot.slane %v105, 5
    %v109 = vadd.f32 %v102, %v107
    %s110 = sld [smem:[#allocation2 + $0x300]]
    %v111 = vstv %s110
    %v112 = vmul.f32 %v111, %v70
    %v114 = vrot.slane %v112, 6
    %v116 = vadd.f32 %v109, %v114
    %s117 = sld [smem:[#allocation2 + $0x380]]
    %v118 = vstv %s117
    %v119 = vmul.f32 %v118, %v70
    %v121 = vrot.slane %v119, 7
    %v123 = vadd.f32 %v116, %v121
    %s124 = sld [smem:[#allocation2 + $0x400]]
    %v125 = vstv %s124
    %v126 = vmul.f32 %v125, %v71
    %v127 = vadd.f32 %v123, %v126
    %s128 = sld [smem:[#allocation2 + $0x480]]
    %v129 = vstv %s128
    %v130 = vmul.f32 %v129, %v71
    %v132 = vrot.slane %v130, 1
    %v134 = vadd.f32 %v127, %v132
    %s135 = sld [smem:[#allocation2 + $0x500]]
    %v136 = vstv %s135
    %v137 = vmul.f32 %v136, %v71
    %v139 = vrot.slane %v137, 2
    %v141 = vadd.f32 %v134, %v139
    %s142 = sld [smem:[#allocation4]]
    %v143 = vstv %s142
    %v144 = vadd.f32 %v141, %v143
    %v145 = vmax.f32 %v144, 0.0
    %s146 = sld [smem:[#allocation2 + $0x1]]
    %v147 = vstv %s146
    %v148 = vmul.f32 %v147, %v70
    %s149 = sld [smem:[#allocation2 + $0x81]]
    %v150 = vstv %s149
    %v151 = vmul.f32 %v150, %v70
    %v153 = vrot.slane %v151, 1
    %v155 = vadd.f32 %v148, %v153
    %s156 = sld [smem:[#allocation2 + $0x101]]
    %v157 = vstv %s156
    %v158 = vmul.f32 %v157, %v70
    %v160 = vrot.slane %v158, 2
    %v162 = vadd.f32 %v155, %v160
    %s163 = sld [smem:[#allocation2 + $0x181]]
    %v164 = vstv %s163
    %v165 = vmul.f32 %v164, %v70
    %v167 = vrot.slane %v165, 3
    %v169 = vadd.f32 %v162, %v167
    %s170 = sld [smem:[#allocation2 + $0x201]]
    %v171 = vstv %s170
    %v172 = vmul.f32 %v171, %v70
    %v174 = vrot.slane %v172, 4
    %v176 = vadd.f32 %v169, %v174
    %s177 = sld [smem:[#allocation2 + $0x281]]
    %v178 = vstv %s177
    %v179 = vmul.f32 %v178, %v70
    %v181 = vrot.slane %v179, 5
    %v183 = vadd.f32 %v176, %v181
    %s184 = sld [smem:[#allocation2 + $0x301]]
    %v185 = vstv %s184
    %v186 = vmul.f32 %v185, %v70
    %v188 = vrot.slane %v186, 6
    %v190 = vadd.f32 %v183, %v188
    %s191 = sld [smem:[#allocation2 + $0x381]]
    %v192 = vstv %s191
    %v193 = vmul.f32 %v192, %v70
    %v195 = vrot.slane %v193, 7
    %v197 = vadd.f32 %v190, %v195
    %s198 = sld [smem:[#allocation2 + $0x401]]
    %v199 = vstv %s198
    %v200 = vmul.f32 %v199, %v71
    %v201 = vadd.f32 %v197, %v200
    %s202 = sld [smem:[#allocation2 + $0x481]]
    %v203 = vstv %s202
    %v204 = vmul.f32 %v203, %v71
    %v206 = vrot.slane %v204, 1
    %v208 = vadd.f32 %v201, %v206
    %s209 = sld [smem:[#allocation2 + $0x501]]
    %v210 = vstv %s209
    %v211 = vmul.f32 %v210, %v71
    %v213 = vrot.slane %v211, 2
    %v215 = vadd.f32 %v208, %v213
    %s216 = sld [smem:[#allocation4 + $0x1]]
    %v217 = vstv %s216
    %v218 = vadd.f32 %v215, %v217
    %v219 = vmax.f32 %v218, 0.0
    %s220 = sld [smem:[#allocation2 + $0x2]]
    %v221 = vstv %s220
    %v222 = vmul.f32 %v221, %v70
    %s223 = sld [smem:[#allocation2 + $0x82]]
    %v224 = vstv %s223
    %v225 = vmul.f32 %v224, %v70
    %v227 = vrot.slane %v225, 1
    %v229 = vadd.f32 %v222, %v227
    %s230 = sld [smem:[#allocation2 + $0x102]]
    %v231 = vstv %s230
    %v232 = vmul.f32 %v231, %v70
    %v234 = vrot.slane %v232, 2
    %v236 = vadd.f32 %v229, %v234
    %s237 = sld [smem:[#allocation2 + $0x182]]
    %v238 = vstv %s237
    %v239 = vmul.f32 %v238, %v70
    %v241 = vrot.slane %v239, 3
    %v243 = vadd.f32 %v236, %v241
    %s244 = sld [smem:[#allocation2 + $0x202]]
    %v245 = vstv %s244
    %v246 = vmul.f32 %v245, %v70
    %v248 = vrot.slane %v246, 4
    %v250 = vadd.f32 %v243, %v248
    %s251 = sld [smem:[#allocation2 + $0x282]]
    %v252 = vstv %s251
    %v253 = vmul.f32 %v252, %v70
    %v255 = vrot.slane %v253, 5
    %v257 = vadd.f32 %v250, %v255
    %s258 = sld [smem:[#allocation2 + $0x302]]
    %v259 = vstv %s258
    %v260 = vmul.f32 %v259, %v70
    %v262 = vrot.slane %v260, 6
    %v264 = vadd.f32 %v257, %v262
    %s265 = sld [smem:[#allocation2 + $0x382]]
    %v266 = vstv %s265
    %v267 = vmul.f32 %v266, %v70
    %v269 = vrot.slane %v267, 7
    %v271 = vadd.f32 %v264, %v269
    %s272 = sld [smem:[#allocation2 + $0x402]]
    %v273 = vstv %s272
    %v274 = vmul.f32 %v273, %v71
    %v275 = vadd.f32 %v271, %v274
    %s276 = sld [smem:[#allocation2 + $0x482]]
    %v277 = vstv %s276
    %v278 = vmul.f32 %v277, %v71
    %v280 = vrot.slane %v278, 1
    %v282 = vadd.f32 %v275, %v280
    %s283 = sld [smem:[#allocation2 + $0x502]]
    %v284 = vstv %s283
    %v285 = vmul.f32 %v284, %v71
    %v287 = vrot.slane %v285, 2
    %v289 = vadd.f32 %v282, %v287
    %s290 = sld [smem:[#allocation4 + $0x2]]
    %v291 = vstv %s290
    %v292 = vadd.f32 %v289, %v291
    %v293 = vmax.f32 %v292, 0.0
    %s294 = sld [smem:[#allocation2 + $0x3]]
    %v295 = vstv %s294
    %v296 = vmul.f32 %v295, %v70
    %s297 = sld [smem:[#allocation2 + $0x83]]
    %v298 = vstv %s297
    %v299 = vmul.f32 %v298, %v70
    %v301 = vrot.slane %v299, 1
    %v303 = vadd.f32 %v296, %v301
    %s304 = sld [smem:[#allocation2 + $0x103]]
    %v305 = vstv %s304
    %v306 = vmul.f32 %v305, %v70
    %v308 = vrot.slane %v306, 2
    %v310 = vadd.f32 %v303, %v308
    %s311 = sld [smem:[#allocation2 + $0x183]]
    %v312 = vstv %s311
    %v313 = vmul.f32 %v312, %v70
    %v315 = vrot.slane %v313, 3
    %v317 = vadd.f32 %v310, %v315
    %s318 = sld [smem:[#allocation2 + $0x203]]
    %v319 = vstv %s318
    %v320 = vmul.f32 %v319, %v70
    %v322 = vrot.slane %v320, 4
    %v324 = vadd.f32 %v317, %v322
    %s325 = sld [smem:[#allocation2 + $0x283]]
    %v326 = vstv %s325
    %v327 = vmul.f32 %v326, %v70
    %v329 = vrot.slane %v327, 5
    %v331 = vadd.f32 %v324, %v329
    %s332 = sld [smem:[#allocation2 + $0x303]]
    %v333 = vstv %s332
    %v334 = vmul.f32 %v333, %v70
    %v336 = vrot.slane %v334, 6
    %v338 = vadd.f32 %v331, %v336
    %s339 = sld [smem:[#allocation2 + $0x383]]
    %v340 = vstv %s339
    %v341 = vmul.f32 %v340, %v70
    %v343 = vrot.slane %v341, 7
    %v345 = vadd.f32 %v338, %v343
    %s346 = sld [smem:[#allocation2 + $0x403]]
    %v347 = vstv %s346
    %v348 = vmul.f32 %v347, %v71
    %v349 = vadd.f32 %v345, %v348
    %s350 = sld [smem:[#allocation2 + $0x483]]
    %v351 = vstv %s350
    %v352 = vmul.f32 %v351, %v71
    %v354 = vrot.slane %v352, 1
    %v356 = vadd.f32 %v349, %v354
    %s357 = sld [smem:[#allocation2 + $0x503]]
    %v358 = vstv %s357
    %v359 = vmul.f32 %v358, %v71
    %v361 = vrot.slane %v359, 2
    %v363 = vadd.f32 %v356, %v361
    %s364 = sld [smem:[#allocation4 + $0x3]]
    %v365 = vstv %s364
    %v366 = vadd.f32 %v363, %v365
    %v367 = vmax.f32 %v366, 0.0
    %s368 = sld [smem:[#allocation2 + $0x4]]
    %v369 = vstv %s368
    %v370 = vmul.f32 %v369, %v70
    %s371 = sld [smem:[#allocation2 + $0x84]]
    %v372 = vstv %s371
    %v373 = vmul.f32 %v372, %v70
    %v375 = vrot.slane %v373, 1
    %v377 = vadd.f32 %v370, %v375
    %s378 = sld [smem:[#allocation2 + $0x104]]
    %v379 = vstv %s378
    %v380 = vmul.f32 %v379, %v70
    %v382 = vrot.slane %v380, 2
    %v384 = vadd.f32 %v377, %v382
    %s385 = sld [smem:[#allocation2 + $0x184]]
    %v386 = vstv %s385
    %v387 = vmul.f32 %v386, %v70
    %v389 = vrot.slane %v387, 3
    %v391 = vadd.f32 %v384, %v389
    %s392 = sld [smem:[#allocation2 + $0x204]]
    %v393 = vstv %s392
    %v394 = vmul.f32 %v393, %v70
    %v396 = vrot.slane %v394, 4
    %v398 = vadd.f32 %v391, %v396
    %s399 = sld [smem:[#allocation2 + $0x284]]
    %v400 = vstv %s399
    %v401 = vmul.f32 %v400, %v70
    %v403 = vrot.slane %v401, 5
    %v405 = vadd.f32 %v398, %v403
    %s406 = sld [smem:[#allocation2 + $0x304]]
    %v407 = vstv %s406
    %v408 = vmul.f32 %v407, %v70
    %v410 = vrot.slane %v408, 6
    %v412 = vadd.f32 %v405, %v410
    %s413 = sld [smem:[#allocation2 + $0x384]]
    %v414 = vstv %s413
    %v415 = vmul.f32 %v414, %v70
    %v417 = vrot.slane %v415, 7
    %v419 = vadd.f32 %v412, %v417
    %s420 = sld [smem:[#allocation2 + $0x404]]
    %v421 = vstv %s420
    %v422 = vmul.f32 %v421, %v71
    %v423 = vadd.f32 %v419, %v422
    %s424 = sld [smem:[#allocation2 + $0x484]]
    %v425 = vstv %s424
    %v426 = vmul.f32 %v425, %v71
    %v428 = vrot.slane %v426, 1
    %v430 = vadd.f32 %v423, %v428
    %s431 = sld [smem:[#allocation2 + $0x504]]
    %v432 = vstv %s431
    %v433 = vmul.f32 %v432, %v71
    %v435 = vrot.slane %v433, 2
    %v437 = vadd.f32 %v430, %v435
    %s438 = sld [smem:[#allocation4 + $0x4]]
    %v439 = vstv %s438
    %v440 = vadd.f32 %v437, %v439
    %v441 = vmax.f32 %v440, 0.0
    %s442 = sld [smem:[#allocation2 + $0x5]]
    %v443 = vstv %s442
    %v444 = vmul.f32 %v443, %v70
    %s445 = sld [smem:[#allocation2 + $0x85]]
    %v446 = vstv %s445
    %v447 = vmul.f32 %v446, %v70
    %v449 = vrot.slane %v447, 1
    %v451 = vadd.f32 %v444, %v449
    %s452 = sld [smem:[#allocation2 + $0x105]]
    %v453 = vstv %s452
    %v454 = vmul.f32 %v453, %v70
    %v456 = vrot.slane %v454, 2
    %v458 = vadd.f32 %v451, %v456
    %s459 = sld [smem:[#allocation2 + $0x185]]
    %v460 = vstv %s459
    %v461 = vmul.f32 %v460, %v70
    %v463 = vrot.slane %v461, 3
    %v465 = vadd.f32 %v458, %v463
    %s466 = sld [smem:[#allocation2 + $0x205]]
    %v467 = vstv %s466
    %v468 = vmul.f32 %v467, %v70
    %v470 = vrot.slane %v468, 4
    %v472 = vadd.f32 %v465, %v470
    %s473 = sld [smem:[#allocation2 + $0x285]]
    %v474 = vstv %s473
    %v475 = vmul.f32 %v474, %v70
    %v477 = vrot.slane %v475, 5
    %v479 = vadd.f32 %v472, %v477
    %s480 = sld [smem:[#allocation2 + $0x305]]
    %v481 = vstv %s480
    %v482 = vmul.f32 %v481, %v70
    %v484 = vrot.slane %v482, 6
    %v486 = vadd.f32 %v479, %v484
    %s487 = sld [smem:[#allocation2 + $0x385]]
    %v488 = vstv %s487
    %v489 = vmul.f32 %v488, %v70
    %v491 = vrot.slane %v489, 7
    %v493 = vadd.f32 %v486, %v491
    %s494 = sld [smem:[#allocation2 + $0x405]]
    %v495 = vstv %s494
    %v496 = vmul.f32 %v495, %v71
    %v497 = vadd.f32 %v493, %v496
    %s498 = sld [smem:[#allocation2 + $0x485]]
    %v499 = vstv %s498
    %v500 = vmul.f32 %v499, %v71
    %v502 = vrot.slane %v500, 1
    %v504 = vadd.f32 %v497, %v502
    %s505 = sld [smem:[#allocation2 + $0x505]]
    %v506 = vstv %s505
    %v507 = vmul.f32 %v506, %v71
    %v509 = vrot.slane %v507, 2
    %v511 = vadd.f32 %v504, %v509
    %s512 = sld [smem:[#allocation4 + $0x5]]
    %v513 = vstv %s512
    %v514 = vadd.f32 %v511, %v513
    %v515 = vmax.f32 %v514, 0.0
    %s516 = sld [smem:[#allocation6]]
    %v517 = vstv %s516
    %v518 = vmul.f32 %v517, %v145
    %s519 = sld [smem:[#allocation6 + $0x80]]
    %v520 = vstv %s519
    %v521 = vmul.f32 %v520, %v219
    %v522 = vadd.f32 %v518, %v521
    %s523 = sld [smem:[#allocation6 + $0x100]]
    %v524 = vstv %s523
    %v525 = vmul.f32 %v524, %v293
    %v526 = vadd.f32 %v522, %v525
    %s527 = sld [smem:[#allocation6 + $0x180]]
    %v528 = vstv %s527
    %v529 = vmul.f32 %v528, %v367
    %v530 = vadd.f32 %v526, %v529
    %s531 = sld [smem:[#allocation6 + $0x200]]
    %v532 = vstv %s531
    %v533 = vmul.f32 %v532, %v441
    %v534 = vadd.f32 %v530, %v533
    %s535 = sld [smem:[#allocation6 + $0x280]]
    %v536 = vstv %s535
    %v537 = vmul.f32 %v536, %v515
    %v538 = vadd.f32 %v534, %v537
    %s539 = sld [smem:[#allocation7]]
    %v540 = vstv %s539
    %v541 = vadd.f32 %v538, %v540
    %v542 = vmul.f32 %v541, 0.5
    %v543 = vtanh.pop %v542
    %544 = vst [vmem:[%s5] sm:$0x1] %v543
    %s545 = sld [smem:[#allocation6 + $0x1]]
    %v546 = vstv %s545
    %v547 = vmul.f32 %v546, %v145
    %s548 = sld [smem:[#allocation6 + $0x81]]
    %v549 = vstv %s548
    %v550 = vmul.f32 %v549, %v219
    %v551 = vadd.f32 %v547, %v550
    %s552 = sld [smem:[#allocation6 + $0x101]]
    %v553 = vstv %s552
    %v554 = vmul.f32 %v553, %v293
    %v555 = vadd.f32 %v551, %v554
    %s556 = sld [smem:[#allocation6 + $0x181]]
    %v557 = vstv %s556
    %v558 = vmul.f32 %v557, %v367
    %v559 = vadd.f32 %v555, %v558
    %s560 = sld [smem:[#allocation6 + $0x201]]
    %v561 = vstv %s560
    %v562 = vmul.f32 %v561, %v441
    %v563 = vadd.f32 %v559, %v562
    %s564 = sld [smem:[#allocation6 + $0x281]]
    %v565 = vstv %s564
    %v566 = vmul.f32 %v565, %v515
    %v567 = vadd.f32 %v563, %v566
    %s568 = sld [smem:[#allocation7 + $0x1]]
    %v569 = vstv %s568
    %v570 = vadd.f32 %v567, %v569
    %v571 = vmul.f32 %v570, 0.5
    %v572 = vtanh.pop %v571
    %573 = vst [vmem:[%s5 + $0x1] sm:$0x1] %v572
    // Predicated region
    $region38: #{net_forward.1} parent=1 // pred_check
      _
    $region39: #{net_forward.1} parent=1 // pred_check_branch
      %575 = sbr.rel (0) target = $region41
    $region40: #{net_forward.1} parent=1 // pred_region
      _
    $region41: #{net_forward.1} parent=1 // pred_fallthru
      _
    // Predicated region
    $region42: #{net_forward.1} parent=1 // pred_check
      _
    $region43: #{net_forward.1} parent=1 // pred_check_branch
      %577 = sbr.rel (0) target = $region45
    $region44: #{net_forward.1} parent=1 // pred_region
      _
    $region45: #{net_forward.1} parent=1 // pred_fallthru
      _
    %578 = vsyncpa [#allocation3], 1
    %579 = vsyncpa [#allocation5], 1
    %580 = vsyncpa [#allocation8], 1

</llo_original>
